<compile_context>
chip_gen: v5e
topology: v5e:2x2
jax: 0.10.0
libtpu: 0.0.40
codegen_flags: <defaults>
</compile_context>

<pallas_src>
import math

import jax
import jax.numpy as jnp
from jax.experimental import pallas as pl
from jax.experimental.pallas import tpu as pltpu


# -------------------------- schedule helpers (plain JAX glue) --------------------------

def cosine_beta_schedule(timesteps, s=0.008):
    steps = timesteps + 1
    x = jnp.linspace(0.0, float(timesteps), steps, dtype=jnp.float32)
    alphas_cumprod = jnp.cos((x / timesteps + s) / (1 + s) * math.pi * 0.5) ** 2
    alphas_cumprod = alphas_cumprod / alphas_cumprod[0]
    betas = 1.0 - alphas_cumprod[1:] / alphas_cumprod[:-1]
    return jnp.clip(betas, 0.0, 0.999)


def sinusoidal_time_embedding(t, dim):
    half = dim // 2
    freqs = jnp.exp(-math.log(10000.0) * jnp.arange(half, dtype=jnp.float32) / (half - 1))
    args = t.astype(jnp.float32)[:, None] * freqs[None, :]
    return jnp.concatenate([jnp.sin(args), jnp.cos(args)], axis=-1)  # (B, dim)


# ------------------------------------ Pallas kernel ------------------------------------

def _diffusion_loss_kernel(
    x0_ref,      # (1, C, TP)   clean image tile, lane-dense (HW on lanes)
    cond_ref,    # (1, C, TP)   conditioning tile
    noise_ref,   # (1, C, TP)   gaussian noise tile
    sa_ref,      # SMEM (B,)    sqrt(alphas_cumprod[t])
    sb_ref,      # SMEM (B,)    sqrt(1 - alphas_cumprod[t])
    bias1_ref,   # (1, Hd, 1)   first-layer bias + time embedding for this batch
    w1x_ref,     # (Hd, C)
    w1c_ref,     # (Hd, C)
    w2_ref,      # (C, Hd)
    b2_ref,      # (C, 1)
    out_ref,     # (1, 8, 128)  per-batch running L1 sum (every element holds the sum)
):
    b = pl.program_id(0)
    p = pl.program_id(1)

    # init the per-batch accumulator at the start of its spatial sweep
    @pl.when(p == 0)
    def _init():
        out_ref[...] = jnp.zeros_like(out_ref)

    x0 = x0_ref[0]        # (C, TP)
    cond = cond_ref[0]    # (C, TP)
    noise = noise_ref[0]  # (C, TP)

    # ---- q_sample: x_t = sqrt(ac[t]) * x0 + sqrt(1-ac[t]) * noise ----
    sa = sa_ref[b]
    sb = sb_ref[b]
    x_t = sa * x0 + sb * noise                      # (C, TP), f32

    # ---- synthetic denoiser: time-conditioned 1x1-conv MLP (channel axis = K) ----
    pre = (
        jnp.dot(w1x_ref[...], x_t, preferred_element_type=jnp.float32)
        + jnp.dot(w1c_ref[...], cond, preferred_element_type=jnp.float32)
        + bias1_ref[0]                               # (Hd, 1) broadcasts over lanes
    )                                                # (Hd, TP)
    act = jnp.maximum(pre, 0.0)
    model_out = (
        jnp.dot(w2_ref[...], act, preferred_element_type=jnp.float32)
        + b2_ref[...]                                # (C, 1) broadcasts over lanes
    )                                                # (C, TP)

    # ---- objective='pred_noise', loss_type='l1': accumulate |model_out - noise| ----
    out_ref[...] += jnp.sum(jnp.abs(model_out - noise))


def _pick_tile(hw):
    for tp in (2048, 1024, 512, 256, 128):
        if hw % tp == 0:
            return tp
    return hw  # fallback: whole spatial extent in one tile


def _fused_diffusion_partial_sums(x0, cond, noise, sa, sb, bias1, w1x_t, w1c_t, w2_t, b2):
    """Returns per-batch L1 sums over (C, HW) in a (B, 8, 128) buffer (value replicated)."""
    B, C, HW = x0.shape
    Hd = w1x_t.shape[0]
    TP = _pick_tile(HW)
    grid = (B, HW // TP)

    img_spec = lambda: pl.BlockSpec((1, C, TP), lambda b, p: (b, 0, p))
    smem = pl.BlockSpec(memory_space=pltpu.MemorySpace.SMEM)
    vmem = pl.BlockSpec(memory_space=pltpu.MemorySpace.VMEM)

    out = pl.pallas_call(
        _diffusion_loss_kernel,
        out_shape=jax.ShapeDtypeStruct((B, 8, 128), jnp.float32),
        grid=grid,
        in_specs=[
            img_spec(), img_spec(), img_spec(),          # x0, cond, noise (pipelined tiles)
            smem, smem,                                  # sa, sb (per-batch scalars)
            pl.BlockSpec((1, Hd, 1), lambda b, p: (b, 0, 0)),  # bias1 (per-batch)
            vmem, vmem, vmem, vmem,                      # w1x_t, w1c_t, w2_t, b2 (resident)
        ],
        out_specs=pl.BlockSpec((1, 8, 128), lambda b, p: (b, 0, 0)),
        compiler_params=pltpu.CompilerParams(
            dimension_semantics=("parallel", "arbitrary"),
        ),
    )(x0, cond, noise, sa, sb, bias1, w1x_t, w1c_t, w2_t, b2)
    return out


# ---------------------------------- module equivalent ----------------------------------

class GaussianDiffusionPallas:
    """JAX/Pallas equivalent of GaussianDiffusion.forward (p_losses path):
       objective='pred_noise', loss_type='l1', beta_schedule='cosine', activate='none',
       p2_loss_weight_gamma=0.0, p2_loss_weight_k=1."""

    def __init__(self, image_size, channels, timesteps=1000, hidden=32,
                 p2_loss_weight_gamma=0.0, p2_loss_weight_k=1.0):
        self.image_size = image_size
        self.channels = channels
        self.num_timesteps = int(timesteps)
        self.hidden = hidden

        betas = cosine_beta_schedule(timesteps)
        alphas = 1.0 - betas
        alphas_cumprod = jnp.cumprod(alphas, axis=0)
        self.sqrt_alphas_cumprod = jnp.sqrt(alphas_cumprod).astype(jnp.float32)
        self.sqrt_one_minus_alphas_cumprod = jnp.sqrt(1.0 - alphas_cumprod).astype(jnp.float32)
        self.p2_loss_weight = (
            (p2_loss_weight_k + alphas_cumprod / (1.0 - alphas_cumprod)) ** (-p2_loss_weight_gamma)
        ).astype(jnp.float32)

        # deterministic synthetic denoiser weights, pre-transposed so the channel axis
        # is the contraction dim against lane-dense (C, TILE_P) tiles.
        wk = jax.random.PRNGKey(42)
        k1, k2, k3 = jax.random.split(wk, 3)
        C, Hd = channels, hidden
        self.w1x_t = (jax.random.normal(k1, (C, Hd), jnp.float32) / math.sqrt(C)).T  # (Hd, C)
        self.w1c_t = (jax.random.normal(k2, (C, Hd), jnp.float32) / math.sqrt(C)).T  # (Hd, C)
        self.b1 = jnp.zeros((Hd,), jnp.float32)
        self.w2_t = (jax.random.normal(k3, (Hd, C), jnp.float32) / math.sqrt(Hd)).T  # (C, Hd)
        self.b2 = jnp.zeros((C, 1), jnp.float32)

    def forward(self, img, cond, key):
        # img, cond: NCHW float32 (PyTorch convention)
        B, C, H, W = img.shape
        assert H == self.image_size and W == self.image_size
        assert C == self.channels
        HW = H * W

        kt, kn = jax.random.split(key)
        t = jax.random.randint(kt, (B,), 0, self.num_timesteps)          # long timesteps
        noise = jax.random.normal(kn, img.shape, jnp.float32)

        # extract(a, t, x.shape) -> per-batch scalars (kept in SMEM inside the kernel)
        sa = self.sqrt_alphas_cumprod[t]                                  # (B,)
        sb = self.sqrt_one_minus_alphas_cumprod[t]                        # (B,)
        p2w = self.p2_loss_weight[t]                                      # (B,)
        temb = sinusoidal_time_embedding(t, self.hidden)                  # (B, Hd)
        bias1 = (self.b1[None, :] + temb)[..., None]                      # (B, Hd, 1)

        # NCHW -> (B, C, H*W): pure reshape (no HBM transpose pass), HW on the lane axis.
        x0 = img.reshape(B, C, HW).astype(jnp.float32)
        cnd = cond.reshape(B, C, HW).astype(jnp.float32)
        nz = noise.reshape(B, C, HW).astype(jnp.float32)

        sums = _fused_diffusion_partial_sums(
            x0, cnd, nz, sa, sb, bias1,
            self.w1x_t, self.w1c_t, self.w2_t, self.b2,
        )                                                                 # (B, 8, 128)

        # finalize (tiny, per-batch): mean over C*H*W, p2 weighting, mean over B.
        per_b = sums[:, 0, 0] / float(C * HW)                             # (B,)
        loss = jnp.mean(per_b * p2w)                                      # scalar
        return loss

    __call__ = forward


# ---------------------------------------- main ----------------------------------------

if __name__ == "__main__":
    key = jax.random.PRNGKey(0)
    B, C, H, W = 2, 4, 16, 16
    k_img, k_cond, k_fwd = jax.random.split(key, 3)

    img = jax.random.normal(k_img, (B, C, H, W), jnp.float32)
    cond = jax.random.normal(k_cond, (B, C, H, W), jnp.float32)

    gd = GaussianDiffusionPallas(image_size=H, channels=C, timesteps=1000, hidden=32)
    loss = gd(img, cond, k_fwd)
    jax.block_until_ready(loss)
    assert loss.shape == () and jnp.isfinite(loss)
    print("KERNEL_OK")
</pallas_src>

<mosaic_0001>
module attributes {stable_mosaic.version = 11 : i64} {
  func.func @_diffusion_loss_kernel(%arg0: i32, %arg1: i32, %arg2: memref<1x4x256xf32, #tpu.memory_space<vmem>>, %arg3: memref<1x4x256xf32, #tpu.memory_space<vmem>>, %arg4: memref<1x4x256xf32, #tpu.memory_space<vmem>>, %arg5: memref<2xf32, #tpu.memory_space<smem>>, %arg6: memref<2xf32, #tpu.memory_space<smem>>, %arg7: memref<1x32x1xf32, #tpu.memory_space<vmem>>, %arg8: memref<32x4xf32, #tpu.memory_space<vmem>>, %arg9: memref<32x4xf32, #tpu.memory_space<vmem>>, %arg10: memref<4x32xf32, #tpu.memory_space<vmem>>, %arg11: memref<4x1xf32, #tpu.memory_space<vmem>>, %arg12: memref<1x8x128xf32, #tpu.memory_space<vmem>>) attributes {dimension_semantics = [#tpu.dimension_semantics<parallel>, #tpu.dimension_semantics<arbitrary>], iteration_bounds = array<i64: 2, 1>, scalar_prefetch = 0 : i64, scratch_operands = 0 : i64, tpu.core_type = #tpu.core_type<tc>, window_params = [{transform_indices = @transform_0, window_bounds = array<i64: 1, 4, 256>}, {transform_indices = @transform_1, window_bounds = array<i64: 1, 4, 256>}, {transform_indices = @transform_2, window_bounds = array<i64: 1, 4, 256>}, {transform_indices = @transform_3, window_bounds = array<i64: 2>}, {transform_indices = @transform_4, window_bounds = array<i64: 2>}, {transform_indices = @transform_5, window_bounds = array<i64: 1, 32, 1>}, {pipeline_mode = #tpu.pipeline_mode<synchronous>, transform_indices = @transform_6, window_bounds = array<i64: 32, 4>}, {pipeline_mode = #tpu.pipeline_mode<synchronous>, transform_indices = @transform_7, window_bounds = array<i64: 32, 4>}, {pipeline_mode = #tpu.pipeline_mode<synchronous>, transform_indices = @transform_8, window_bounds = array<i64: 4, 32>}, {pipeline_mode = #tpu.pipeline_mode<synchronous>, transform_indices = @transform_9, window_bounds = array<i64: 4, 1>}, {transform_indices = @transform_10, window_bounds = array<i64: 1, 8, 128>}]} {
    %c0_i32 = arith.constant 0 : i32
    %0 = arith.cmpi eq, %arg1, %c0_i32 : i32
    %1 = arith.extui %0 : i1 to i32
    %c0_i32_0 = arith.constant 0 : i32
    %2 = arith.cmpi ne, %1, %c0_i32_0 : i32
    scf.if %2 {
      %cst_30 = arith.constant 0.000000e+00 : f32
      %44 = vector.broadcast %cst_30 : f32 to vector<1x8x128xf32>
      %c0_31 = arith.constant 0 : index
      %c0_32 = arith.constant 0 : index
      %c0_33 = arith.constant 0 : index
      %45 = vector.load %arg12[%c0_31, %c0_32, %c0_33] : memref<1x8x128xf32, #tpu.memory_space<vmem>>, vector<1x8x128xf32>
      tpu.vector_store %arg12[%c0_31, %c0_32, %c0_33], %44 {strides = array<i32>} : memref<1x8x128xf32, #tpu.memory_space<vmem>>, vector<1x8x128xf32>,
    } else {
    }
    %c0 = arith.constant 0 : index
    %c0_1 = arith.constant 0 : index
    %c0_2 = arith.constant 0 : index
    %3 = vector.load %arg2[%c0, %c0_1, %c0_2] : memref<1x4x256xf32, #tpu.memory_space<vmem>>, vector<1x4x256xf32>
    %4 = vector.shape_cast %3 : vector<1x4x256xf32> to vector<4x256xf32>
    %c0_3 = arith.constant 0 : index
    %c0_4 = arith.constant 0 : index
    %c0_5 = arith.constant 0 : index
    %5 = vector.load %arg3[%c0_3, %c0_4, %c0_5] : memref<1x4x256xf32, #tpu.memory_space<vmem>>, vector<1x4x256xf32>
    %6 = vector.shape_cast %5 : vector<1x4x256xf32> to vector<4x256xf32>
    %c0_6 = arith.constant 0 : index
    %c0_7 = arith.constant 0 : index
    %c0_8 = arith.constant 0 : index
    %7 = vector.load %arg4[%c0_6, %c0_7, %c0_8] : memref<1x4x256xf32, #tpu.memory_space<vmem>>, vector<1x4x256xf32>
    %8 = vector.shape_cast %7 : vector<1x4x256xf32> to vector<4x256xf32>
    %9 = arith.index_cast %arg0 : i32 to index
    %10 = memref.load %arg5[%9] : memref<2xf32, #tpu.memory_space<smem>>
    %11 = arith.index_cast %arg0 : i32 to index
    %12 = memref.load %arg6[%11] : memref<2xf32, #tpu.memory_space<smem>>
    %13 = vector.broadcast %10 : f32 to vector<4x256xf32>
    %14 = arith.mulf %13, %4 : vector<4x256xf32>
    %15 = vector.broadcast %12 : f32 to vector<4x256xf32>
    %16 = arith.mulf %15, %8 : vector<4x256xf32>
    %17 = arith.addf %14, %16 : vector<4x256xf32>
    %c0_9 = arith.constant 0 : index
    %c0_10 = arith.constant 0 : index
    %18 = vector.load %arg8[%c0_9, %c0_10] : memref<32x4xf32, #tpu.memory_space<vmem>>, vector<32x4xf32>
    %cst = arith.constant dense<0.000000e+00> : vector<32x256xf32>
    %19 = tpu.matmul %18, %17, %cst {dimension_numbers = #tpu.dot_dimension_numbers<[1], [0], [0], [1], [0, 0, 1, 1], [], []>} : vector<32x4xf32>, vector<4x256xf32>, vector<32x256xf32> -> vector<32x256xf32>
    %c0_11 = arith.constant 0 : index
    %c0_12 = arith.constant 0 : index
    %20 = vector.load %arg9[%c0_11, %c0_12] : memref<32x4xf32, #tpu.memory_space<vmem>>, vector<32x4xf32>
    %cst_13 = arith.constant dense<0.000000e+00> : vector<32x256xf32>
    %21 = tpu.matmul %20, %6, %cst_13 {dimension_numbers = #tpu.dot_dimension_numbers<[1], [0], [0], [1], [0, 0, 1, 1], [], []>} : vector<32x4xf32>, vector<4x256xf32>, vector<32x256xf32> -> vector<32x256xf32>
    %22 = arith.addf %19, %21 : vector<32x256xf32>
    %c0_14 = arith.constant 0 : index
    %c0_15 = arith.constant 0 : index
    %c0_16 = arith.constant 0 : index
    %23 = vector.load %arg7[%c0_14, %c0_15, %c0_16] : memref<1x32x1xf32, #tpu.memory_space<vmem>>, vector<1x32x1xf32>
    %24 = vector.shape_cast %23 : vector<1x32x1xf32> to vector<32x1xf32>
    %25 = vector.broadcast %24 : vector<32x1xf32> to vector<32x256xf32>
    %26 = arith.addf %22, %25 : vector<32x256xf32>
    %cst_17 = arith.constant 0.000000e+00 : f32
    %27 = vector.broadcast %cst_17 : f32 to vector<32x256xf32>
    %28 = arith.maximumf %26, %27 : vector<32x256xf32>
    %c0_18 = arith.constant 0 : index
    %c0_19 = arith.constant 0 : index
    %29 = vector.load %arg10[%c0_18, %c0_19] : memref<4x32xf32, #tpu.memory_space<vmem>>, vector<4x32xf32>
    %cst_20 = arith.constant dense<0.000000e+00> : vector<4x256xf32>
    %30 = tpu.matmul %29, %28, %cst_20 {dimension_numbers = #tpu.dot_dimension_numbers<[1], [0], [0], [1], [0, 0, 1, 1], [], []>} : vector<4x32xf32>, vector<32x256xf32>, vector<4x256xf32> -> vector<4x256xf32>
    %c0_21 = arith.constant 0 : index
    %c0_22 = arith.constant 0 : index
    %31 = vector.load %arg11[%c0_21, %c0_22] : memref<4x1xf32, #tpu.memory_space<vmem>>, vector<4x1xf32>
    %32 = vector.broadcast %31 : vector<4x1xf32> to vector<4x256xf32>
    %33 = arith.addf %30, %32 : vector<4x256xf32>
    %c0_23 = arith.constant 0 : index
    %c0_24 = arith.constant 0 : index
    %c0_25 = arith.constant 0 : index
    %34 = vector.load %arg12[%c0_23, %c0_24, %c0_25] : memref<1x8x128xf32, #tpu.memory_space<vmem>>, vector<1x8x128xf32>
    %35 = arith.subf %33, %8 : vector<4x256xf32>
    %36 = math.absf %35 : vector<4x256xf32>
    %37 = vector.shape_cast %36 : vector<4x256xf32> to vector<1x4x256xf32>
    %cst_26 = arith.constant dense<0.000000e+00> : vector<1xf32>
    %38 = vector.multi_reduction <add>, %37, %cst_26 [1, 2] : vector<1x4x256xf32> to vector<1xf32>
    %39 = vector.shape_cast %38 : vector<1xf32> to vector<1x1x1xf32>
    %40 = vector.extract %39[0, 0, 0] : f32 from vector<1x1x1xf32>
    %41 = vector.broadcast %40 : f32 to vector<1x8x128xf32>
    %42 = arith.addf %34, %41 : vector<1x8x128xf32>
    %c0_27 = arith.constant 0 : index
    %c0_28 = arith.constant 0 : index
    %c0_29 = arith.constant 0 : index
    %43 = vector.load %arg12[%c0_27, %c0_28, %c0_29] : memref<1x8x128xf32, #tpu.memory_space<vmem>>, vector<1x8x128xf32>
    tpu.vector_store %arg12[%c0_27, %c0_28, %c0_29], %42 {strides = array<i32>} : memref<1x8x128xf32, #tpu.memory_space<vmem>>, vector<1x8x128xf32>,
    return
  }
  func.func @transform_0(%arg0: i32, %arg1: i32) -> (i32, i32, i32) {
    %c0_i32 = arith.constant 0 : i32
    %c0_i32_0 = arith.constant 0 : i32
    return %arg0, %c0_i32, %arg1 : i32, i32, i32
  }
  func.func @transform_1(%arg0: i32, %arg1: i32) -> (i32, i32, i32) {
    %c0_i32 = arith.constant 0 : i32
    %c0_i32_0 = arith.constant 0 : i32
    return %arg0, %c0_i32, %arg1 : i32, i32, i32
  }
  func.func @transform_2(%arg0: i32, %arg1: i32) -> (i32, i32, i32) {
    %c0_i32 = arith.constant 0 : i32
    %c0_i32_0 = arith.constant 0 : i32
    return %arg0, %c0_i32, %arg1 : i32, i32, i32
  }
  func.func @transform_3(%arg0: i32, %arg1: i32) -> i32 {
    %c0_i32 = arith.constant 0 : i32
    %c0_i32_0 = arith.constant 0 : i32
    return %c0_i32 : i32
  }
  func.func @transform_4(%arg0: i32, %arg1: i32) -> i32 {
    %c0_i32 = arith.constant 0 : i32
    %c0_i32_0 = arith.constant 0 : i32
    return %c0_i32 : i32
  }
  func.func @transform_5(%arg0: i32, %arg1: i32) -> (i32, i32, i32) {
    %c0_i32 = arith.constant 0 : i32
    %c0_i32_0 = arith.constant 0 : i32
    %c0_i32_1 = arith.constant 0 : i32
    return %arg0, %c0_i32, %c0_i32_0 : i32, i32, i32
  }
  func.func @transform_6(%arg0: i32, %arg1: i32) -> (i32, i32) {
    %c0_i32 = arith.constant 0 : i32
    %c0_i32_0 = arith.constant 0 : i32
    %c0_i32_1 = arith.constant 0 : i32
    return %c0_i32, %c0_i32_0 : i32, i32
  }
  func.func @transform_7(%arg0: i32, %arg1: i32) -> (i32, i32) {
    %c0_i32 = arith.constant 0 : i32
    %c0_i32_0 = arith.constant 0 : i32
    %c0_i32_1 = arith.constant 0 : i32
    return %c0_i32, %c0_i32_0 : i32, i32
  }
  func.func @transform_8(%arg0: i32, %arg1: i32) -> (i32, i32) {
    %c0_i32 = arith.constant 0 : i32
    %c0_i32_0 = arith.constant 0 : i32
    %c0_i32_1 = arith.constant 0 : i32
    return %c0_i32, %c0_i32_0 : i32, i32
  }
  func.func @transform_9(%arg0: i32, %arg1: i32) -> (i32, i32) {
    %c0_i32 = arith.constant 0 : i32
    %c0_i32_0 = arith.constant 0 : i32
    %c0_i32_1 = arith.constant 0 : i32
    return %c0_i32, %c0_i32_0 : i32, i32
  }
  func.func @transform_10(%arg0: i32, %arg1: i32) -> (i32, i32, i32) {
    %c0_i32 = arith.constant 0 : i32
    %c0_i32_0 = arith.constant 0 : i32
    %c0_i32_1 = arith.constant 0 : i32
    return %arg0, %c0_i32, %c0_i32_0 : i32, i32, i32
  }
}

</mosaic_0001>

<llo_original>
// kernel: tpu_custom_call.1
$region0: #{tpu_custom_call.1}
  #allocation0 [shape = 'u32[]', space=smem, size = 0x4, offset = 0x4, fixed_abs, tag = 'smem constant byte address 0x4 - core index']
  #allocation1 [shape = 'u32[72,128]{1,0:T(1,128)}', space=vmem, size = 0x9000, scoped, tag = 'internal scratch']
  %s0 = inlined_call_operand.vmem [shape: f32[2,4,256], index: 0, kind: input, shape index: {}]
  %s1 = inlined_call_operand.vmem [shape: f32[2,4,256], index: 1, kind: input, shape index: {}]
  %s2 = inlined_call_operand.vmem [shape: f32[2,4,256], index: 2, kind: input, shape index: {}]
  %s3 = inlined_call_operand.vmem [shape: f32[2], index: 3, kind: input, shape index: {}]
  %s4 = inlined_call_operand.vmem [shape: f32[2], index: 4, kind: input, shape index: {}]
  %s5 = inlined_call_operand.vmem [shape: f32[2,32,1], index: 5, kind: input, shape index: {}]
  %s6 = inlined_call_operand.vmem [shape: f32[32,4], index: 6, kind: input, shape index: {}]
  %s7 = inlined_call_operand.vmem [shape: f32[32,4], index: 7, kind: input, shape index: {}]
  %s8 = inlined_call_operand.vmem [shape: f32[4,32], index: 8, kind: input, shape index: {}]
  %s9 = inlined_call_operand.vmem [shape: f32[4,1], index: 9, kind: input, shape index: {}]
  %s10 = inlined_call_operand.hbm [shape: f32[2,8,128], index: 10, kind: output, shape index: {}]
  %s11 = sld [smem:[#allocation0]]
  $region85: #{tpu_custom_call.1} parent=0
    _
  %s13 = ssub.s32 1, %s11
  %s14 = scalar_select 0, %s13, %s11
  $region1: #{tpu_custom_call.1} parent=0
    #allocation2 [shape = 'u8[512]{0}', space=smem, size = 0x200, scoped, tag = 'input window, operand 3, single buffered']
    #allocation3 [shape = 's32[2]{0}', space=sflag, size = 0x8, scoped, tag = 'scoped memory for tpu_custom_call.1']
    #allocation4 [shape = 's32[2]{0}', space=sflag, size = 0x8, scoped, tag = 'scoped memory for tpu_custom_call.1']
    #allocation5 [shape = 'u8[512]{0}', space=smem, size = 0x200, scoped, tag = 'input window, operand 4, single buffered']
    #allocation6 [shape = 's32[1]{0}', space=sflag, size = 0x4, scoped, tag = 'scoped memory for tpu_custom_call.1']
    #allocation7 [shape = 'u8[8192]{0}', space=vmem, size = 0x2000, scoped, tag = 'output window, operand 0']
    %15 = vsyncpa [#allocation4], 0
    %16 = vsyncpa [#allocation6], 0
    %17 = vsyncpa [#allocation3], 0
    %s18 = scalar_lea.sflag [#allocation3], 1
    %19 = vsyncpa %s18, 0
    loop: start=0, step=1, limit=4
    $region2: #{tpu_custom_call.1} parent=1 // loop_pre_header
      _
    $region3: #{tpu_custom_call.1} parent=1 // loop_header
      %s21 = sphi 0, %s25
      %p22 = scmp.ge.s32.totalorder %s21, 4
      %s28 = sphi 0, %s40
      %s29 = sphi 0, %s36
      %s30 = sphi 0, %s28
      %s31 = sphi 0, %s29
      %s32 = sphi 0, %s30
      %s33 = sphi 0, %s31
      %s45 = sphi 0, %s47
      %s48 = sphi 0, %s45
      %s49 = sphi 0, %s48
      %s65 = sphi 0, %s49
      %s73 = sphi 0, %s75
      %s76 = sphi 0, %s73
      %s77 = sphi 0, %s76
      %s93 = sphi 0, %s77
      %s101 = sphi 0, %s103
      %s104 = sphi 0, %s101
      %s105 = sphi 0, %s104
      %s121 = sphi 0, %s105
      %s125 = sphi 0, %s125
      %s127 = sphi 0, %s125
      %s128 = sphi 0, %s127
      %s142 = sphi 0, %s128
      %s146 = sphi 0, %s146
      %s148 = sphi 0, %s146
      %s149 = sphi 0, %s148
      %s163 = sphi 0, %s149
      %s169 = sphi 0, %s171
      %s172 = sphi 0, %s169
      %s173 = sphi 0, %s172
      %s189 = sphi 0, %s173
      %s193 = sphi 0, %s193
      %s195 = sphi 0, %s193
      %s196 = sphi 0, %s195
      %s210 = sphi 0, %s196
      %s214 = sphi 0, %s214
      %s216 = sphi 0, %s214
      %s217 = sphi 0, %s216
      %s231 = sphi 0, %s217
      %s235 = sphi 0, %s235
      %s237 = sphi 0, %s235
      %s238 = sphi 0, %s237
      %s252 = sphi 0, %s238
      %s256 = sphi 0, %s256
      %s258 = sphi 0, %s256
      %s259 = sphi 0, %s258
      %s273 = sphi 0, %s259
      %s279 = sphi 0, %s281
      %s282 = sphi 0, %s279
      %s283 = sphi 0, %s282
      %s299 = sphi 0, %s283
    $region4: #{tpu_custom_call.1} parent=1 // loop_header_branch
      %24 = sbr.rel (%p22) target = $region8
    $region5: #{tpu_custom_call.1} parent=1 // loop_body
      %s26 = ssub.s32 %s21, 1
      %s27 = ssub.s32 %s21, 2
      %s34 = sadd.s32 1, %s29
      %p35 = scmp.ge.s32.totalorder %s34, 1
      %s36 = scalar_select %p35, 0, %s34
      %s37 = sadd.s32 1, %s28
      %s38 = scalar_select %p35, %s37, %s28
      %p39 = scmp.ge.s32.totalorder %s38, 2
      %s40 = scalar_select %p39, 0, %s38
      %s41 = ssub.s32 %s28, %s40
      %s42 = ssub.s32 %s29, %s36
      %s43 = sor.u32 %s41, %s42
      %p44 = scmp.eq.s32.totalorder %s43, 0
      %s46 = sadd.s32 %s45, 1
      %s47 = scalar_select %p44, %s45, %s46
      %p50 = pneg %p44
      %p51 = scmp.eq.s32.totalorder %s21, 1
      %p52 = por %p50, %p51
      %p53 = scmp.ne.s32.totalorder %s45, %s48
      %p54 = scmp.eq.s32.totalorder %s21, 0
      %p55 = por %p53, %p54
      %p56 = scmp.ne.s32.totalorder %s45, %s48
      %p57 = scmp.eq.s32.totalorder %s26, 1
      %p58 = por %p56, %p57
      %p59 = scmp.ne.s32.totalorder %s48, %s49
      %p60 = scmp.eq.s32.totalorder %s26, 0
      %p61 = por %p59, %p60
      %p62 = scmp.ne.s32.totalorder %s48, %s49
      %p63 = scmp.eq.s32.totalorder %s27, 1
      %p64 = por %p62, %p63
      %p66 = scmp.ne.s32.totalorder %s49, %s65
      %p67 = scmp.eq.s32.totalorder %s27, 0
      %p68 = por %p66, %p67
      %s69 = ssub.s32 %s28, %s40
      %s70 = ssub.s32 %s29, %s36
      %s71 = sor.u32 %s69, %s70
      %p72 = scmp.eq.s32.totalorder %s71, 0
      %s74 = sadd.s32 %s73, 1
      %s75 = scalar_select %p72, %s73, %s74
      %p78 = pneg %p72
      %p79 = scmp.eq.s32.totalorder %s21, 1
      %p80 = por %p78, %p79
      %p81 = scmp.ne.s32.totalorder %s73, %s76
      %p82 = scmp.eq.s32.totalorder %s21, 0
      %p83 = por %p81, %p82
      %p84 = scmp.ne.s32.totalorder %s73, %s76
      %p85 = scmp.eq.s32.totalorder %s26, 1
      %p86 = por %p84, %p85
      %p87 = scmp.ne.s32.totalorder %s76, %s77
      %p88 = scmp.eq.s32.totalorder %s26, 0
      %p89 = por %p87, %p88
      %p90 = scmp.ne.s32.totalorder %s76, %s77
      %p91 = scmp.eq.s32.totalorder %s27, 1
      %p92 = por %p90, %p91
      %p94 = scmp.ne.s32.totalorder %s77, %s93
      %p95 = scmp.eq.s32.totalorder %s27, 0
      %p96 = por %p94, %p95
      %s97 = ssub.s32 %s28, %s40
      %s98 = ssub.s32 %s29, %s36
      %s99 = sor.u32 %s97, %s98
      %p100 = scmp.eq.s32.totalorder %s99, 0
      %s102 = sadd.s32 %s101, 1
      %s103 = scalar_select %p100, %s101, %s102
      %p106 = pneg %p100
      %p107 = scmp.eq.s32.totalorder %s21, 1
      %p108 = por %p106, %p107
      %p109 = scmp.ne.s32.totalorder %s101, %s104
      %p110 = scmp.eq.s32.totalorder %s21, 0
      %p111 = por %p109, %p110
      %p112 = scmp.ne.s32.totalorder %s101, %s104
      %p113 = scmp.eq.s32.totalorder %s26, 1
      %p114 = por %p112, %p113
      %p115 = scmp.ne.s32.totalorder %s104, %s105
      %p116 = scmp.eq.s32.totalorder %s26, 0
      %p117 = por %p115, %p116
      %p118 = scmp.ne.s32.totalorder %s104, %s105
      %p119 = scmp.eq.s32.totalorder %s27, 1
      %p120 = por %p118, %p119
      %p122 = scmp.ne.s32.totalorder %s105, %s121
      %p123 = scmp.eq.s32.totalorder %s27, 0
      %p124 = por %p122, %p123
      %s126 = sadd.s32 %s125, 1
      %p129 = scmp.eq.s32.totalorder %s21, 1
      %p130 = scmp.ne.s32.totalorder %s125, %s127
      %p131 = scmp.eq.s32.totalorder %s21, 0
      %p132 = por %p130, %p131
      %p133 = scmp.ne.s32.totalorder %s125, %s127
      %p134 = scmp.eq.s32.totalorder %s26, 1
      %p135 = por %p133, %p134
      %p136 = scmp.ne.s32.totalorder %s127, %s128
      %p137 = scmp.eq.s32.totalorder %s26, 0
      %p138 = por %p136, %p137
      %p139 = scmp.ne.s32.totalorder %s127, %s128
      %p140 = scmp.eq.s32.totalorder %s27, 1
      %p141 = por %p139, %p140
      %p143 = scmp.ne.s32.totalorder %s128, %s142
      %p144 = scmp.eq.s32.totalorder %s27, 0
      %p145 = por %p143, %p144
      %s147 = sadd.s32 %s146, 1
      %p150 = scmp.eq.s32.totalorder %s21, 1
      %p151 = scmp.ne.s32.totalorder %s146, %s148
      %p152 = scmp.eq.s32.totalorder %s21, 0
      %p153 = por %p151, %p152
      %p154 = scmp.ne.s32.totalorder %s146, %s148
      %p155 = scmp.eq.s32.totalorder %s26, 1
      %p156 = por %p154, %p155
      %p157 = scmp.ne.s32.totalorder %s148, %s149
      %p158 = scmp.eq.s32.totalorder %s26, 0
      %p159 = por %p157, %p158
      %p160 = scmp.ne.s32.totalorder %s148, %s149
      %p161 = scmp.eq.s32.totalorder %s27, 1
      %p162 = por %p160, %p161
      %p164 = scmp.ne.s32.totalorder %s149, %s163
      %p165 = scmp.eq.s32.totalorder %s27, 0
      %p166 = por %p164, %p165
      %s167 = ssub.s32 %s28, %s40
      %p168 = scmp.eq.s32.totalorder %s167, 0
      %s170 = sadd.s32 %s169, 1
      %s171 = scalar_select %p168, %s169, %s170
      %p174 = pneg %p168
      %p175 = scmp.eq.s32.totalorder %s21, 1
      %p176 = por %p174, %p175
      %p177 = scmp.ne.s32.totalorder %s169, %s172
      %p178 = scmp.eq.s32.totalorder %s21, 0
      %p179 = por %p177, %p178
      %p180 = scmp.ne.s32.totalorder %s169, %s172
      %p181 = scmp.eq.s32.totalorder %s26, 1
      %p182 = por %p180, %p181
      %p183 = scmp.ne.s32.totalorder %s172, %s173
      %p184 = scmp.eq.s32.totalorder %s26, 0
      %p185 = por %p183, %p184
      %p186 = scmp.ne.s32.totalorder %s172, %s173
      %p187 = scmp.eq.s32.totalorder %s27, 1
      %p188 = por %p186, %p187
      %p190 = scmp.ne.s32.totalorder %s173, %s189
      %p191 = scmp.eq.s32.totalorder %s27, 0
      %p192 = por %p190, %p191
      %s194 = sadd.s32 %s193, 1
      %p197 = scmp.eq.s32.totalorder %s21, 1
      %p198 = scmp.ne.s32.totalorder %s193, %s195
      %p199 = scmp.eq.s32.totalorder %s21, 0
      %p200 = por %p198, %p199
      %p201 = scmp.ne.s32.totalorder %s193, %s195
      %p202 = scmp.eq.s32.totalorder %s26, 1
      %p203 = por %p201, %p202
      %p204 = scmp.ne.s32.totalorder %s195, %s196
      %p205 = scmp.eq.s32.totalorder %s26, 0
      %p206 = por %p204, %p205
      %p207 = scmp.ne.s32.totalorder %s195, %s196
      %p208 = scmp.eq.s32.totalorder %s27, 1
      %p209 = por %p207, %p208
      %p211 = scmp.ne.s32.totalorder %s196, %s210
      %p212 = scmp.eq.s32.totalorder %s27, 0
      %p213 = por %p211, %p212
      %s215 = sadd.s32 %s214, 1
      %p218 = scmp.eq.s32.totalorder %s21, 1
      %p219 = scmp.ne.s32.totalorder %s214, %s216
      %p220 = scmp.eq.s32.totalorder %s21, 0
      %p221 = por %p219, %p220
      %p222 = scmp.ne.s32.totalorder %s214, %s216
      %p223 = scmp.eq.s32.totalorder %s26, 1
      %p224 = por %p222, %p223
      %p225 = scmp.ne.s32.totalorder %s216, %s217
      %p226 = scmp.eq.s32.totalorder %s26, 0
      %p227 = por %p225, %p226
      %p228 = scmp.ne.s32.totalorder %s216, %s217
      %p229 = scmp.eq.s32.totalorder %s27, 1
      %p230 = por %p228, %p229
      %p232 = scmp.ne.s32.totalorder %s217, %s231
      %p233 = scmp.eq.s32.totalorder %s27, 0
      %p234 = por %p232, %p233
      %s236 = sadd.s32 %s235, 1
      %p239 = scmp.eq.s32.totalorder %s21, 1
      %p240 = scmp.ne.s32.totalorder %s235, %s237
      %p241 = scmp.eq.s32.totalorder %s21, 0
      %p242 = por %p240, %p241
      %p243 = scmp.ne.s32.totalorder %s235, %s237
      %p244 = scmp.eq.s32.totalorder %s26, 1
      %p245 = por %p243, %p244
      %p246 = scmp.ne.s32.totalorder %s237, %s238
      %p247 = scmp.eq.s32.totalorder %s26, 0
      %p248 = por %p246, %p247
      %p249 = scmp.ne.s32.totalorder %s237, %s238
      %p250 = scmp.eq.s32.totalorder %s27, 1
      %p251 = por %p249, %p250
      %p253 = scmp.ne.s32.totalorder %s238, %s252
      %p254 = scmp.eq.s32.totalorder %s27, 0
      %p255 = por %p253, %p254
      %s257 = sadd.s32 %s256, 1
      %p260 = scmp.eq.s32.totalorder %s21, 1
      %p261 = scmp.ne.s32.totalorder %s256, %s258
      %p262 = scmp.eq.s32.totalorder %s21, 0
      %p263 = por %p261, %p262
      %p264 = scmp.ne.s32.totalorder %s256, %s258
      %p265 = scmp.eq.s32.totalorder %s26, 1
      %p266 = por %p264, %p265
      %p267 = scmp.ne.s32.totalorder %s258, %s259
      %p268 = scmp.eq.s32.totalorder %s26, 0
      %p269 = por %p267, %p268
      %p270 = scmp.ne.s32.totalorder %s258, %s259
      %p271 = scmp.eq.s32.totalorder %s27, 1
      %p272 = por %p270, %p271
      %p274 = scmp.ne.s32.totalorder %s259, %s273
      %p275 = scmp.eq.s32.totalorder %s27, 0
      %p276 = por %p274, %p275
      %s277 = ssub.s32 %s28, %s40
      %p278 = scmp.eq.s32.totalorder %s277, 0
      %s280 = sadd.s32 %s279, 1
      %s281 = scalar_select %p278, %s279, %s280
      %p284 = pneg %p278
      %p285 = scmp.eq.s32.totalorder %s21, 1
      %p286 = por %p284, %p285
      %p287 = scmp.ne.s32.totalorder %s279, %s282
      %p288 = scmp.eq.s32.totalorder %s21, 0
      %p289 = por %p287, %p288
      %p290 = scmp.ne.s32.totalorder %s279, %s282
      %p291 = scmp.eq.s32.totalorder %s26, 1
      %p292 = por %p290, %p291
      %p293 = scmp.ne.s32.totalorder %s282, %s283
      %p294 = scmp.eq.s32.totalorder %s26, 0
      %p295 = por %p293, %p294
      %p296 = scmp.ne.s32.totalorder %s282, %s283
      %p297 = scmp.eq.s32.totalorder %s27, 1
      %p298 = por %p296, %p297
      %p300 = scmp.ne.s32.totalorder %s283, %s299
      %p301 = scmp.eq.s32.totalorder %s27, 0
      %p302 = por %p300, %p301
      %p303 = scmp.le.s32.totalorder 1, %s21
      %p304 = scmp.lt.s32.totalorder %s21, 3
      %p305 = pnand %p303, %p304
      %p306 = pneg %p305
      // Predicated region
      $region9: #{tpu_custom_call.1} parent=5 // pred_check
        _
      $region10: #{tpu_custom_call.1} parent=5 // pred_check_branch
        %308 = sbr.rel (%p305) target = $region12
      $region11: #{tpu_custom_call.1} parent=5 // pred_region
        %s309 = ssub.s32 %s21, 1
        // Predicated region
        $region13: #{tpu_custom_call.1} parent=11 // pred_check
          %p310 = pneg %p138
        $region14: #{tpu_custom_call.1} parent=11 // pred_check_branch
          %312 = sbr.rel (%p310) target = $region16
        $region15: #{tpu_custom_call.1} parent=11 // pred_region
          %314 = vsyncadd [#allocation4], 0
          %s316 = sshll.u32 %s3, 4
          %s317 = int_to_ptr.vmem [resolvable:$true] %s316
          %319 = dma.vmem_to_smem %s317, 16, [#allocation2], [#allocation4]
        $region16: #{tpu_custom_call.1} parent=11 // pred_fallthru
          _
        // Predicated region
        $region17: #{tpu_custom_call.1} parent=11 // pred_check
          %p320 = pneg %p159
        $region18: #{tpu_custom_call.1} parent=11 // pred_check_branch
          %322 = sbr.rel (%p320) target = $region20
        $region19: #{tpu_custom_call.1} parent=11 // pred_region
          %324 = vsyncadd [#allocation6], 0
          %s326 = sshll.u32 %s4, 4
          %s327 = int_to_ptr.vmem [resolvable:$true] %s326
          %329 = dma.vmem_to_smem %s327, 16, [#allocation5], [#allocation6]
        $region20: #{tpu_custom_call.1} parent=11 // pred_fallthru
          _
        // Predicated region
        $region21: #{tpu_custom_call.1} parent=11 // pred_check
          %p330 = pneg %p206
        $region22: #{tpu_custom_call.1} parent=11 // pred_check_branch
          %332 = sbr.rel (%p330) target = $region24
        $region23: #{tpu_custom_call.1} parent=11 // pred_region
          _
        $region24: #{tpu_custom_call.1} parent=11 // pred_fallthru
          _
        // Predicated region
        $region25: #{tpu_custom_call.1} parent=11 // pred_check
          %p333 = pneg %p227
        $region26: #{tpu_custom_call.1} parent=11 // pred_check_branch
          %335 = sbr.rel (%p333) target = $region28
        $region27: #{tpu_custom_call.1} parent=11 // pred_region
          _
        $region28: #{tpu_custom_call.1} parent=11 // pred_fallthru
          _
        // Predicated region
        $region29: #{tpu_custom_call.1} parent=11 // pred_check
          %p336 = pneg %p248
        $region30: #{tpu_custom_call.1} parent=11 // pred_check_branch
          %338 = sbr.rel (%p336) target = $region32
        $region31: #{tpu_custom_call.1} parent=11 // pred_region
          _
        $region32: #{tpu_custom_call.1} parent=11 // pred_fallthru
          _
        // Predicated region
        $region33: #{tpu_custom_call.1} parent=11 // pred_check
          %p339 = pneg %p269
        $region34: #{tpu_custom_call.1} parent=11 // pred_check_branch
          %341 = sbr.rel (%p339) target = $region36
        $region35: #{tpu_custom_call.1} parent=11 // pred_region
          _
        $region36: #{tpu_custom_call.1} parent=11 // pred_fallthru
          _
      $region12: #{tpu_custom_call.1} parent=5 // pred_fallthru
        _
      %p342 = scmp.lt.s32.totalorder %s21, 2
      // Predicated region
      $region37: #{tpu_custom_call.1} parent=5 // pred_check
        %p343 = pneg %p342
      $region38: #{tpu_custom_call.1} parent=5 // pred_check_branch
        %345 = sbr.rel (%p343) target = $region40
      $region39: #{tpu_custom_call.1} parent=5 // pred_region
        // Predicated region
        $region41: #{tpu_custom_call.1} parent=39 // pred_check
          %p346 = pneg %p55
        $region42: #{tpu_custom_call.1} parent=39 // pred_check_branch
          %348 = sbr.rel (%p346) target = $region44
        $region43: #{tpu_custom_call.1} parent=39 // pred_region
          %s349 = smul.u32 2, %s29
          %p350 = scmp.lt.s32.totalorder %s28, 1
          %s351 = scalar_select %p350, %s28, 1
          %p352 = scmp.lt.s32.totalorder %s349, 1
          %s353 = scalar_select %p352, %s349, 1
          %s354 = smul.addr %s351, 2
          %s355 = sadd.s32 %s353, %s354
          %s356 = smul.addr %s355, 4
          %s357 = scalar_lea.vmem %s0, %s356
          %s358 = smul.u32 2, %s29
        $region44: #{tpu_custom_call.1} parent=39 // pred_fallthru
          _
        // Predicated region
        $region45: #{tpu_custom_call.1} parent=39 // pred_check
          %p359 = pneg %p83
        $region46: #{tpu_custom_call.1} parent=39 // pred_check_branch
          %361 = sbr.rel (%p359) target = $region48
        $region47: #{tpu_custom_call.1} parent=39 // pred_region
          %s362 = smul.u32 2, %s29
          %p363 = scmp.lt.s32.totalorder %s28, 1
          %s364 = scalar_select %p363, %s28, 1
          %p365 = scmp.lt.s32.totalorder %s362, 1
          %s366 = scalar_select %p365, %s362, 1
          %s367 = smul.addr %s364, 2
          %s368 = sadd.s32 %s366, %s367
          %s369 = smul.addr %s368, 4
          %s370 = scalar_lea.vmem %s1, %s369
          %s371 = smul.u32 2, %s29
        $region48: #{tpu_custom_call.1} parent=39 // pred_fallthru
          _
        // Predicated region
        $region49: #{tpu_custom_call.1} parent=39 // pred_check
          %p372 = pneg %p111
        $region50: #{tpu_custom_call.1} parent=39 // pred_check_branch
          %374 = sbr.rel (%p372) target = $region52
        $region51: #{tpu_custom_call.1} parent=39 // pred_region
          %s375 = smul.u32 2, %s29
          %p376 = scmp.lt.s32.totalorder %s28, 1
          %s377 = scalar_select %p376, %s28, 1
          %p378 = scmp.lt.s32.totalorder %s375, 1
          %s379 = scalar_select %p378, %s375, 1
          %s380 = smul.addr %s377, 2
          %s381 = sadd.s32 %s379, %s380
          %s382 = smul.addr %s381, 4
          %s383 = scalar_lea.vmem %s2, %s382
          %s384 = smul.u32 2, %s29
        $region52: #{tpu_custom_call.1} parent=39 // pred_fallthru
          _
        // Predicated region
        $region53: #{tpu_custom_call.1} parent=39 // pred_check
          %p385 = pneg %p179
        $region54: #{tpu_custom_call.1} parent=39 // pred_check_branch
          %387 = sbr.rel (%p385) target = $region56
        $region55: #{tpu_custom_call.1} parent=39 // pred_region
          %p388 = scmp.lt.s32.totalorder %s28, 1
          %s389 = scalar_select %p388, %s28, 1
          %s390 = smul.addr %s389, 4
          %s391 = smul.addr %s390, 8
          %s392 = scalar_lea.vmem %s5, %s391
        $region56: #{tpu_custom_call.1} parent=39 // pred_fallthru
          _
      $region40: #{tpu_custom_call.1} parent=5 // pred_fallthru
        _
      %p393 = scmp.le.s32.totalorder 1, %s21
      %p394 = scmp.lt.s32.totalorder %s21, 3
      %p395 = pnand %p393, %p394
      %p396 = pneg %p395
      // Predicated region
      $region57: #{tpu_custom_call.1} parent=5 // pred_check
        _
      $region58: #{tpu_custom_call.1} parent=5 // pred_check_branch
        %398 = sbr.rel (%p395) target = $region60
      $region59: #{tpu_custom_call.1} parent=5 // pred_region
        %s399 = ssub.s32 %s21, 1
        // Predicated region
        $region61: #{tpu_custom_call.1} parent=59 // pred_check
          %p400 = pneg %p138
        $region62: #{tpu_custom_call.1} parent=59 // pred_check_branch
          %402 = sbr.rel (%p400) target = $region64
        $region63: #{tpu_custom_call.1} parent=59 // pred_region
          %404 = dma.done [#allocation4], 16
        $region64: #{tpu_custom_call.1} parent=59 // pred_fallthru
          _
        // Predicated region
        $region65: #{tpu_custom_call.1} parent=59 // pred_check
          %p405 = pneg %p159
        $region66: #{tpu_custom_call.1} parent=59 // pred_check_branch
          %407 = sbr.rel (%p405) target = $region68
        $region67: #{tpu_custom_call.1} parent=59 // pred_region
          %409 = dma.done [#allocation6], 16
        $region68: #{tpu_custom_call.1} parent=59 // pred_fallthru
          _
        %410 = sfence
        %s411 = smul.u32 2, %s31
        %p412 = scmp.lt.s32.totalorder %s30, 1
        %s413 = scalar_select %p412, %s30, 1
        %p414 = scmp.lt.s32.totalorder %s411, 1
        %s415 = scalar_select %p414, %s411, 1
        %s416 = smul.addr %s413, 2
        %s417 = sadd.s32 %s415, %s416
        %s418 = smul.addr %s417, 4
        %s419 = scalar_lea.vmem %s0, %s418
        %p420 = pneg %p61
        %p421 = pneg %p58
        %s422 = smul.u32 2, %s31
        %p423 = scmp.lt.s32.totalorder %s30, 1
        %s424 = scalar_select %p423, %s30, 1
        %p425 = scmp.lt.s32.totalorder %s422, 1
        %s426 = scalar_select %p425, %s422, 1
        %s427 = smul.addr %s424, 2
        %s428 = sadd.s32 %s426, %s427
        %s429 = smul.addr %s428, 4
        %s430 = scalar_lea.vmem %s1, %s429
        %p431 = pneg %p89
        %p432 = pneg %p86
        %s433 = smul.u32 2, %s31
        %p434 = scmp.lt.s32.totalorder %s30, 1
        %s435 = scalar_select %p434, %s30, 1
        %p436 = scmp.lt.s32.totalorder %s433, 1
        %s437 = scalar_select %p436, %s433, 1
        %s438 = smul.addr %s435, 2
        %s439 = sadd.s32 %s437, %s438
        %s440 = smul.addr %s439, 4
        %s441 = scalar_lea.vmem %s2, %s440
        %p442 = pneg %p117
        %p443 = pneg %p114
        %p444 = pneg %p138
        %p445 = pneg %p135
        %p446 = pneg %p159
        %p447 = pneg %p156
        %p448 = scmp.lt.s32.totalorder %s30, 1
        %s449 = scalar_select %p448, %s30, 1
        %s450 = smul.addr %s449, 4
        %s451 = smul.addr %s450, 8
        %s452 = scalar_lea.vmem %s5, %s451
        %p453 = pneg %p185
        %p454 = pneg %p182
        %p455 = pneg %p206
        %p456 = pneg %p203
        %p457 = pneg %p227
        %p458 = pneg %p224
        %p459 = pneg %p248
        %p460 = pneg %p245
        %p461 = pneg %p269
        %p462 = pneg %p266
        %p463 = pneg %p295
        %p464 = pneg %p292
        %s465 = sand.u32 %s282, 1
        %s466 = scalar_lea.sflag [#allocation3], %s465
        %s467 = sand.u32 %s282, 1
        %s468 = smul.addr %s467, 8
        %s469 = scalar_lea.vmem [#allocation7], %s468
        %s470 = smul.u32 2, %s31
        %p471 = scmp.lt.s32.totalorder %s30, 1
        %s472 = scalar_select %p471, %s30, 1
        %p473 = scmp.lt.s32.totalorder %s470, 1
        %s474 = scalar_select %p473, %s470, 1
        %s475 = smul.addr %s472, 2
        %s476 = sadd.s32 %s474, %s475
        %s477 = smul.addr %s476, 4
        %s478 = scalar_lea.vmem %s0, %s477
        %s479 = smul.u32 2, %s31
        %s480 = smul.u32 2, %s31
        %p481 = scmp.lt.s32.totalorder %s30, 1
        %s482 = scalar_select %p481, %s30, 1
        %p483 = scmp.lt.s32.totalorder %s480, 1
        %s484 = scalar_select %p483, %s480, 1
        %s485 = smul.addr %s482, 2
        %s486 = sadd.s32 %s484, %s485
        %s487 = smul.addr %s486, 4
        %s488 = scalar_lea.vmem %s1, %s487
        %s489 = smul.u32 2, %s31
        %s490 = smul.u32 2, %s31
        %p491 = scmp.lt.s32.totalorder %s30, 1
        %s492 = scalar_select %p491, %s30, 1
        %p493 = scmp.lt.s32.totalorder %s490, 1
        %s494 = scalar_select %p493, %s490, 1
        %s495 = smul.addr %s492, 2
        %s496 = sadd.s32 %s494, %s495
        %s497 = smul.addr %s496, 4
        %s498 = scalar_lea.vmem %s2, %s497
        %s499 = smul.u32 2, %s31
        %p500 = scmp.lt.s32.totalorder %s30, 1
        %s501 = scalar_select %p500, %s30, 1
        %s502 = smul.addr %s501, 4
        %s503 = smul.addr %s502, 8
        %s504 = scalar_lea.vmem %s5, %s503
        %p505 = scmp.eq.s32.totalorder %s31, 0
        // Predicated region
        $region69: #{tpu_custom_call.1} parent=59 // pred_check
          %p506 = pneg %p505
        $region70: #{tpu_custom_call.1} parent=59 // pred_check_branch
          %508 = sbr.rel (%p506) target = $region72
        $region71: #{tpu_custom_call.1} parent=59 // pred_region
          %509 = vst [vmem:[%s469] sm:$0xff] 0.0
        $region72: #{tpu_custom_call.1} parent=59 // pred_fallthru
          _
        %v510 = vld [vmem:[%s478] sm:$0xff]
        %v511 = vld [vmem:[%s488] sm:$0xff]
        %v512 = vld [vmem:[%s498] sm:$0xff]
        %s513 = sld [smem:[#allocation2 + %s30]]
        %s514 = sld [smem:[#allocation5 + %s30]]
        %v515 = vstv %s513
        %v516 = vmul.f32 %v515, %v510
        %v517 = vstv %s514
        %v518 = vmul.f32 %v517, %v512
        %v519 = vadd.f32 %v516, %v518
        %v520 = vld [vmem:[%s6] sm:$0xff]
        %v521 = vld [vmem:[%s6 + $0x8] sm:$0xff]
        %v522 = vld [vmem:[%s6 + $0x10] sm:$0xff]
        %v523 = vld [vmem:[%s6 + $0x18] sm:$0xff]
        %v524 = vld [vmem:[%s7] sm:$0xff]
        %v525 = vld [vmem:[%s7 + $0x8] sm:$0xff]
        %v526 = vld [vmem:[%s7 + $0x10] sm:$0xff]
        %v527 = vld [vmem:[%s7 + $0x18] sm:$0xff]
        %529 = vst [vmem:[#allocation1] ss:$2 sm:$0xff] %v511
        %v530 = vld.sshfl [vmem:[#allocation1] sm:$0xff pattern:$0x75316420]
        %v531 = vld.sshfl [vmem:[#allocation1 + $0x8] sm:$0xff pattern:$0x75316420]
        %vm532 = vcmask 31744
        %v534 = vsel %vm532, %v524, 0
        %v537 = vsel %vm532, %v525, 0
        %v540 = vsel %vm532, %v526, 0
        %v543 = vsel %vm532, %v527, 0
        %vm545 = vcmask 1043456
        %v546 = vsel %vm545, %v530, 0
        %v548 = vsel %vm545, %v531, 0
        %550 = vmatpush.msra.mxu0 0.0
        %551 = vmatpush.msra.mxu0 0.0
        %552 = vmatpush.msra.mxu0 0.0
        %553 = vmatpush.msra.mxu0 0.0
        %554 = vmatpush.msra.mxu0 0.0
        %555 = vmatpush.msra.mxu0 0.0
        %556 = vmatpush.msra.mxu0 0.0
        %557 = vmatpush.msra.mxu0 0.0
        %558 = vmatpush.msra.mxu0 0.0
        %559 = vmatpush.msra.mxu0 0.0
        %560 = vmatpush.msra.mxu0 0.0
        %561 = vmatpush.msra.mxu0 0.0
        %562 = vmatpush.msra.mxu0 0.0
        %563 = vmatpush.msra.mxu0 0.0
        %564 = vmatpush.msra.mxu0 0.0
        %565 = vmatpush.msra.mxu0 %v546
        %566 = vmatmul.f32.gmra.mxu0 %v534
        %v567 = vpop.f32.mrf.mxu0
        %v568 = vadd.f32 0.0, %v567
        %569 = vmatmul.f32.gmra.mxu0 %v537
        %v570 = vpop.f32.mrf.mxu0
        %v571 = vadd.f32 0.0, %v570
        %572 = vmatmul.f32.gmra.mxu0 %v540
        %v573 = vpop.f32.mrf.mxu0
        %v574 = vadd.f32 0.0, %v573
        %575 = vmatmul.f32.gmra.mxu0 %v543
        %v576 = vpop.f32.mrf.mxu0
        %v577 = vadd.f32 0.0, %v576
        %578 = vdwg.mxu0
        %579 = vmatpush.msra.mxu0 0.0
        %580 = vmatpush.msra.mxu0 0.0
        %581 = vmatpush.msra.mxu0 0.0
        %582 = vmatpush.msra.mxu0 0.0
        %583 = vmatpush.msra.mxu0 0.0
        %584 = vmatpush.msra.mxu0 0.0
        %585 = vmatpush.msra.mxu0 0.0
        %586 = vmatpush.msra.mxu0 0.0
        %587 = vmatpush.msra.mxu0 0.0
        %588 = vmatpush.msra.mxu0 0.0
        %589 = vmatpush.msra.mxu0 0.0
        %590 = vmatpush.msra.mxu0 0.0
        %591 = vmatpush.msra.mxu0 0.0
        %592 = vmatpush.msra.mxu0 0.0
        %593 = vmatpush.msra.mxu0 0.0
        %594 = vmatpush.msra.mxu0 %v548
        %595 = vmatmul.f32.gmra.mxu0 %v534
        %v596 = vpop.f32.mrf.mxu0
        %v597 = vadd.f32 0.0, %v596
        %598 = vmatmul.f32.gmra.mxu0 %v537
        %v599 = vpop.f32.mrf.mxu0
        %v600 = vadd.f32 0.0, %v599
        %601 = vmatmul.f32.gmra.mxu0 %v540
        %v602 = vpop.f32.mrf.mxu0
        %v603 = vadd.f32 0.0, %v602
        %604 = vmatmul.f32.gmra.mxu0 %v543
        %v605 = vpop.f32.mrf.mxu0
        %v606 = vadd.f32 0.0, %v605
        %607 = vdwg.mxu0
        %609 = vst [vmem:[#allocation1] ss:$2 sm:$0xff] %v519
        %v610 = vld.sshfl [vmem:[#allocation1] sm:$0xff pattern:$0x75316420]
        %v611 = vld.sshfl [vmem:[#allocation1 + $0x8] sm:$0xff pattern:$0x75316420]
        %v613 = vsel %vm532, %v520, 0
        %v616 = vsel %vm532, %v521, 0
        %v619 = vsel %vm532, %v522, 0
        %v622 = vsel %vm532, %v523, 0
        %v624 = vsel %vm545, %v610, 0
        %v626 = vsel %vm545, %v611, 0
        %628 = vmatpush.msra.mxu0 0.0
        %629 = vmatpush.msra.mxu0 0.0
        %630 = vmatpush.msra.mxu0 0.0
        %631 = vmatpush.msra.mxu0 0.0
        %632 = vmatpush.msra.mxu0 0.0
        %633 = vmatpush.msra.mxu0 0.0
        %634 = vmatpush.msra.mxu0 0.0
        %635 = vmatpush.msra.mxu0 0.0
        %636 = vmatpush.msra.mxu0 0.0
        %637 = vmatpush.msra.mxu0 0.0
        %638 = vmatpush.msra.mxu0 0.0
        %639 = vmatpush.msra.mxu0 0.0
        %640 = vmatpush.msra.mxu0 0.0
        %641 = vmatpush.msra.mxu0 0.0
        %642 = vmatpush.msra.mxu0 0.0
        %643 = vmatpush.msra.mxu0 %v624
        %644 = vmatmul.f32.gmra.mxu0 %v613
        %v645 = vpop.f32.mrf.mxu0
        %v646 = vadd.f32 %v568, %v645
        %647 = vmatmul.f32.gmra.mxu0 %v616
        %v648 = vpop.f32.mrf.mxu0
        %v649 = vadd.f32 %v571, %v648
        %650 = vmatmul.f32.gmra.mxu0 %v619
        %v651 = vpop.f32.mrf.mxu0
        %v652 = vadd.f32 %v574, %v651
        %653 = vmatmul.f32.gmra.mxu0 %v622
        %v654 = vpop.f32.mrf.mxu0
        %v655 = vadd.f32 %v577, %v654
        %656 = vdwg.mxu0
        %657 = vmatpush.msra.mxu0 0.0
        %658 = vmatpush.msra.mxu0 0.0
        %659 = vmatpush.msra.mxu0 0.0
        %660 = vmatpush.msra.mxu0 0.0
        %661 = vmatpush.msra.mxu0 0.0
        %662 = vmatpush.msra.mxu0 0.0
        %663 = vmatpush.msra.mxu0 0.0
        %664 = vmatpush.msra.mxu0 0.0
        %665 = vmatpush.msra.mxu0 0.0
        %666 = vmatpush.msra.mxu0 0.0
        %667 = vmatpush.msra.mxu0 0.0
        %668 = vmatpush.msra.mxu0 0.0
        %669 = vmatpush.msra.mxu0 0.0
        %670 = vmatpush.msra.mxu0 0.0
        %671 = vmatpush.msra.mxu0 0.0
        %672 = vmatpush.msra.mxu0 %v626
        %673 = vmatmul.f32.gmra.mxu0 %v613
        %v674 = vpop.f32.mrf.mxu0
        %v675 = vadd.f32 %v597, %v674
        %676 = vmatmul.f32.gmra.mxu0 %v616
        %v677 = vpop.f32.mrf.mxu0
        %v678 = vadd.f32 %v600, %v677
        %679 = vmatmul.f32.gmra.mxu0 %v619
        %v680 = vpop.f32.mrf.mxu0
        %v681 = vadd.f32 %v603, %v680
        %682 = vmatmul.f32.gmra.mxu0 %v622
        %v683 = vpop.f32.mrf.mxu0
        %v684 = vadd.f32 %v606, %v683
        %685 = vdwg.mxu0
        %v686 = vld [vmem:[%s504] sm:$0xff]
        %v687 = vld [vmem:[%s504 + $0x8] sm:$0xff]
        %v688 = vld [vmem:[%s504 + $0x10] sm:$0xff]
        %v689 = vld [vmem:[%s504 + $0x18] sm:$0xff]
        %691 = vset.pattern.permute.xlu0 0
        %692 = vperm.xlu0 %691, %v686
        %v693 = vpop.permute.xlu0 %692
        %696 = vset.pattern.permute.xlu0 0
        %697 = vperm.xlu0 %696, %v687
        %v698 = vpop.permute.xlu0 %697
        %701 = vset.pattern.permute.xlu0 0
        %702 = vperm.xlu0 %701, %v688
        %v703 = vpop.permute.xlu0 %702
        %706 = vset.pattern.permute.xlu0 0
        %707 = vperm.xlu0 %706, %v689
        %v708 = vpop.permute.xlu0 %707
        %v710 = vadd.f32 %v646, %v693
        %v711 = vadd.f32 %v675, %v693
        %v712 = vadd.f32 %v649, %v698
        %v713 = vadd.f32 %v678, %v698
        %v714 = vadd.f32 %v652, %v703
        %v715 = vadd.f32 %v681, %v703
        %v716 = vadd.f32 %v655, %v708
        %v717 = vadd.f32 %v684, %v708
        %v718 = vmax.f32 %v710, 0.0
        %v719 = vmax.f32 %v711, 0.0
        %v720 = vmax.f32 %v712, 0.0
        %v721 = vmax.f32 %v713, 0.0
        %v722 = vmax.f32 %v714, 0.0
        %v723 = vmax.f32 %v715, 0.0
        %v724 = vmax.f32 %v716, 0.0
        %v725 = vmax.f32 %v717, 0.0
        %v726 = vld [vmem:[%s8] sm:$0xf]
        %v727 = vld [vmem:[%s9] sm:$0xf]
        %729 = vset.pattern.permute.xlu0 0
        %730 = vperm.xlu0 %729, %v727
        %v731 = vpop.permute.xlu0 %730
        %vm733 = vcmask 261120
        %v735 = vsel %vm733, %v726, 0
        %737 = vmatpush.msra.mxu0 0.0
        %738 = vmatpush.msra.mxu0 0.0
        %739 = vmatpush.msra.mxu0 0.0
        %740 = vmatpush.msra.mxu0 0.0
        %741 = vmatpush.msra.mxu0 0.0
        %742 = vmatpush.msra.mxu0 0.0
        %743 = vmatpush.msra.mxu0 0.0
        %744 = vmatpush.msra.mxu0 0.0
        %745 = vmatpush.msra.mxu0 0.0
        %746 = vmatpush.msra.mxu0 0.0
        %747 = vmatpush.msra.mxu0 0.0
        %748 = vmatpush.msra.mxu0 0.0
        %749 = vmatpush.msra.mxu0 %v724
        %750 = vmatpush.msra.mxu0 %v722
        %751 = vmatpush.msra.mxu0 %v720
        %752 = vmatpush.msra.mxu0 %v718
        %753 = vmatmul.f32.gmra.mxu0 %v735
        %v754 = vpop.f32.mrf.mxu0
        %v755 = vadd.f32 %v731, %v754
        %756 = vdwg.mxu0
        %757 = vmatpush.msra.mxu0 0.0
        %758 = vmatpush.msra.mxu0 0.0
        %759 = vmatpush.msra.mxu0 0.0
        %760 = vmatpush.msra.mxu0 0.0
        %761 = vmatpush.msra.mxu0 0.0
        %762 = vmatpush.msra.mxu0 0.0
        %763 = vmatpush.msra.mxu0 0.0
        %764 = vmatpush.msra.mxu0 0.0
        %765 = vmatpush.msra.mxu0 0.0
        %766 = vmatpush.msra.mxu0 0.0
        %767 = vmatpush.msra.mxu0 0.0
        %768 = vmatpush.msra.mxu0 0.0
        %769 = vmatpush.msra.mxu0 %v725
        %770 = vmatpush.msra.mxu0 %v723
        %771 = vmatpush.msra.mxu0 %v721
        %772 = vmatpush.msra.mxu0 %v719
        %773 = vmatmul.f32.gmra.mxu0 %v735
        %v774 = vpop.f32.mrf.mxu0
        %v775 = vadd.f32 %v731, %v774
        %776 = vdwg.mxu0
        %v777 = vld [vmem:[%s469] sm:$0xff]
        %779 = vst [vmem:[#allocation1] ss:$2 sm:$0xff] %v512
        %v780 = vld.sshfl [vmem:[#allocation1] sm:$0xff pattern:$0x75316420]
        %v781 = vld.sshfl [vmem:[#allocation1 + $0x8] sm:$0xff pattern:$0x75316420]
        %v784 = vsub.f32 %v755, %v780
        %v785 = vsub.f32 %v775, %v781
        %v786 = vand.u32 2147483647, %v784
        %v787 = vand.u32 2147483647, %v785
        %v788 = vsel %vm545, %v786, 0.0
        %v789 = vsel %vm545, %v787, 0.0
        %v790 = vadd.f32 %v788, %v789
        %791 = vadd.xlane.f32.xlu0 %v790
        %v792 = vpop.xlane.xlu0 %791
        %v793 = vrot.slane %v792, 4
        %v794 = vadd.f32 %v792, %v793
        %v795 = vrot.slane %v794, 2
        %v796 = vadd.f32 %v794, %v795
        %v797 = vrot.slane %v796, 1
        %v798 = vadd.f32 %v796, %v797
        %s799 = vtos %v798
        %v800 = vstv %s799
        %v801 = vadd.f32 %v777, %v800
        %802 = vst [vmem:[%s469] sm:$0xff] %v801
        %s803 = sand.u32 %s282, 1
        %s804 = scalar_lea.sflag [#allocation3], %s803
        %s805 = sand.u32 %s282, 1
        %s806 = smul.addr %s805, 8
        %s807 = scalar_lea.vmem [#allocation7], %s806
        // Predicated region
        $region73: #{tpu_custom_call.1} parent=59 // pred_check
          %p808 = pneg %p292
        $region74: #{tpu_custom_call.1} parent=59 // pred_check_branch
          %810 = sbr.rel (%p808) target = $region76
        $region75: #{tpu_custom_call.1} parent=59 // pred_region
          %812 = vsyncadd %s804, 0
          %s813 = smul.addr %s30, 8
          %s814 = scalar_lea.hbm %s10, %s813
          %s816 = sshll.u32 %s807, 4
          %s817 = int_to_ptr.vmem [resolvable:$true] %s816
          %s818 = sshll.u32 %s814, 4
          %s819 = int_to_ptr.hbm [resolvable:$true] %s818
          %821 = dma.vmem_to_hbm [thread:$0]  %s817, 128, %s819, %s804
        $region76: #{tpu_custom_call.1} parent=59 // pred_fallthru
          _
      $region60: #{tpu_custom_call.1} parent=5 // pred_fallthru
        _
      %p822 = scmp.le.s32.totalorder 2, %s21
      // Predicated region
      $region77: #{tpu_custom_call.1} parent=5 // pred_check
        %p823 = pneg %p822
      $region78: #{tpu_custom_call.1} parent=5 // pred_check_branch
        %825 = sbr.rel (%p823) target = $region80
      $region79: #{tpu_custom_call.1} parent=5 // pred_region
        %s826 = ssub.s32 %s21, 2
        // Predicated region
        $region81: #{tpu_custom_call.1} parent=79 // pred_check
          %p827 = pneg %p298
        $region82: #{tpu_custom_call.1} parent=79 // pred_check_branch
          %829 = sbr.rel (%p827) target = $region84
        $region83: #{tpu_custom_call.1} parent=79 // pred_region
          %s830 = sand.u32 %s283, 1
          %s831 = scalar_lea.sflag [#allocation3], %s830
          %s832 = sand.u32 %s283, 1
          %s833 = smul.addr %s832, 8
          %s834 = scalar_lea.vmem [#allocation7], %s833
          %836 = dma.done %s831, 128
        $region84: #{tpu_custom_call.1} parent=79 // pred_fallthru
          _
      $region80: #{tpu_custom_call.1} parent=5 // pred_fallthru
        _
    $region6: #{tpu_custom_call.1} parent=1 // loop_footer
      %s25 = sadd.s32 1, %s21
    $region7: #{tpu_custom_call.1} parent=1 // loop_footer_branch
      %20 = sbr.rel target = $region3
    $region8: #{tpu_custom_call.1} parent=1 // loop_exit
      _
    %837 = vsyncpa [#allocation3], 1
    %s838 = scalar_lea.sflag [#allocation3], 1
    %839 = vsyncpa %s838, 1
    %840 = vsyncpa [#allocation4], 1
    %s841 = scalar_lea.sflag [#allocation4], 1
    %842 = vsyncpa %s841, 1
    %843 = vsyncpa [#allocation6], 1

</llo_original>
